<compile_context>
chip_gen: v6e
topology: v6e:2x2x1
jax: 0.10.0
libtpu: 0.0.40
codegen_flags: <defaults>
</compile_context>

<pallas_src>
import jax
import jax.numpy as jnp
from jax.experimental import pallas as pl
from jax.experimental.pallas import tpu as pltpu

HID_SIZE = 128
NUM_HEADS = 6        # mean_x, mean_y, var_minor, var_delta, major_axis_angle, value
NUM_HEADS_PAD = 8    # pad the head axis to the f32 sublane multiple


def _cdiv(a, b):
    return (a + b - 1) // b


def _round_up(n, m):
    return _cdiv(n, m) * m


def _make_kernel(x_batch_major):
    def kernel(x_ref, wb_ref, bb_ref, wh_ref, bh_ref, out_ref):
        # x_ref  : (TB, obs) if x_batch_major else (obs, TB)
        # wb_ref : (HID, obs)            f32, PyTorch Linear layout
        # bb_ref : (HID, 1)              f32
        # wh_ref : (NUM_HEADS_PAD, HID)  f32, six head weights stacked + zero pad
        # bh_ref : (NUM_HEADS_PAD, 1)    f32
        # out_ref: (NUM_HEADS_PAD, TB)   f32 -- batch on the lane axis (dense store)
        x = x_ref[...].astype(jnp.float32)
        if x_batch_major:
            # h^T = W_base @ x^T: contract the obs axes directly (no transpose op).
            ht = jax.lax.dot_general(
                wb_ref[...], x,
                dimension_numbers=(((1,), (1,)), ((), ())),
                preferred_element_type=jnp.float32)                  # [HID, TB]
        else:
            # x already batch-minor: plain matmul.
            ht = jnp.dot(wb_ref[...], x,
                         preferred_element_type=jnp.float32)         # [HID, TB]
        h = jnp.maximum(ht + bb_ref[...], 0.0)                       # bias + ReLU

        # z^T = W_heads @ h^T  (all six heads fused into one small matmul)
        zt = jnp.dot(wh_ref[...], h,
                     preferred_element_type=jnp.float32) + bh_ref[...]   # [8, TB]

        # rows 0,1,4 -> tanh ; rows 2,3 -> softplus ; row 5 -> identity
        row = jax.lax.broadcasted_iota(jnp.int32, zt.shape, dimension=0)
        tanh_mask = (row == 0) | (row == 1) | (row == 4)
        sp_mask = (row == 2) | (row == 3)
        t = jnp.tanh(zt)
        sp = jnp.maximum(zt, 0.0) + jnp.log1p(jnp.exp(-jnp.abs(zt)))  # stable softplus
        out = jnp.where(tanh_mask, t, jnp.where(sp_mask, sp, zt))
        out_ref[...] = out.astype(out_ref.dtype)
    return kernel


def _tile_and_vmem(B, obs_size):
    """Pick the batch tile TB and a safe scoped-VMEM limit."""
    # Per batch column (f32 bytes): double-buffered x tile + out tile, plus a
    # generous allowance for the compiler-managed [HID, TB] / [8, TB]
    # temporaries (hidden activations, head pre/post-activations).
    per_col = 4 * (2 * obs_size + 2 * NUM_HEADS_PAD
                   + 3 * HID_SIZE + 4 * NUM_HEADS_PAD)
    budget = 12 << 20                               # comfortably inside v5e/v6e/v7x
    tb_vmem = max(128, (budget // per_col) // 128 * 128)
    tb_two = _round_up(_cdiv(B, 2), 128)            # keep >=2 grid steps (v7x megacore)
    tb = max(128, min(4096, tb_vmem, tb_two))
    weight_bytes = 4 * (HID_SIZE * obs_size + HID_SIZE
                        + NUM_HEADS_PAD * HID_SIZE + NUM_HEADS_PAD)
    vmem_limit = int(min(max(per_col * tb + weight_bytes + (2 << 20), 16 << 20),
                         48 << 20))
    return tb, vmem_limit


def _forward_slab(x, wb, bb, wh, bh, *, x_batch_major):
    if x_batch_major:
        B, obs_size = x.shape
    else:
        obs_size, B = x.shape
    assert wb.shape == (HID_SIZE, obs_size)
    assert bb.shape == (HID_SIZE, 1)
    assert wh.shape == (NUM_HEADS_PAD, HID_SIZE)
    assert bh.shape == (NUM_HEADS_PAD, 1)

    TB, vmem_limit = _tile_and_vmem(B, obs_size)
    grid = (_cdiv(B, TB),)                          # partial last block; no jnp.pad pass

    if x_batch_major:
        x_spec = pl.BlockSpec((TB, obs_size), lambda i: (i, 0))
    else:
        x_spec = pl.BlockSpec((obs_size, TB), lambda i: (0, i))

    out = pl.pallas_call(
        _make_kernel(x_batch_major),
        out_shape=jax.ShapeDtypeStruct((NUM_HEADS_PAD, B), jnp.float32),
        grid=grid,
        in_specs=[
            x_spec,                                                     # x tiles
            pl.BlockSpec((HID_SIZE, obs_size), lambda i: (0, 0)),       # resident
            pl.BlockSpec((HID_SIZE, 1), lambda i: (0, 0)),              # resident
            pl.BlockSpec((NUM_HEADS_PAD, HID_SIZE), lambda i: (0, 0)),  # resident
            pl.BlockSpec((NUM_HEADS_PAD, 1), lambda i: (0, 0)),         # resident
        ],
        out_specs=pl.BlockSpec((NUM_HEADS_PAD, TB), lambda i: (0, i)),
        compiler_params=pltpu.CompilerParams(
            dimension_semantics=("parallel",),      # shard batch tiles on v7x TCs
            vmem_limit_bytes=vmem_limit),
    )(x, wb, bb, wh, bh)
    return out[:NUM_HEADS]                           # [6, B] lane-dense slab


@jax.jit
def model_a2c_forward_slab(x, wb, bb, wh, bh):
    """x: [B, obs_size] (PyTorch layout). Returns lane-dense [6, B] f32 slab."""
    return _forward_slab(x, wb, bb, wh, bh, x_batch_major=True)


@jax.jit
def model_a2c_forward_slab_xt(x_t, wb, bb, wh, bh):
    """x_t: [obs_size, B] (batch-minor). Avoids lane-padding of the x stream
    when obs_size < 128. Returns lane-dense [6, B] f32 slab."""
    return _forward_slab(x_t, wb, bb, wh, bh, x_batch_major=False)


def split_heads(slab):
    """Split the [6, B] slab into the PyTorch-style tuple of six [B, 1] heads.
    Use only where a consumer actually needs column vectors."""
    return tuple(slab[k][:, None] for k in range(NUM_HEADS))


def model_a2c_forward(x, wb, bb, wh, bh):
    """PyTorch-matching forward: returns
    (mean_x, mean_y, var_minor, var_delta, major_axis_angle, value), each [B,1]."""
    return split_heads(model_a2c_forward_slab(x, wb, bb, wh, bh))


def prepare_params(w_base, b_base, w_head, b_head):
    """One-time packing of PyTorch-layout params (hoisted out of the forward)."""
    obs_size = w_base.shape[1]
    assert w_base.shape == (HID_SIZE, obs_size)
    assert b_base.shape == (HID_SIZE,)
    assert w_head.shape == (NUM_HEADS, HID_SIZE)
    assert b_head.shape == (NUM_HEADS,)
    wb = jnp.asarray(w_base, jnp.float32)
    bb = jnp.asarray(b_base, jnp.float32).reshape(HID_SIZE, 1)
    wh = jnp.zeros((NUM_HEADS_PAD, HID_SIZE), jnp.float32).at[:NUM_HEADS].set(
        jnp.asarray(w_head, jnp.float32))
    bh = jnp.zeros((NUM_HEADS_PAD, 1), jnp.float32).at[:NUM_HEADS, 0].set(
        jnp.asarray(b_head, jnp.float32))
    return wb, bb, wh, bh


def init_params(key, obs_size):
    """Deterministic synthetic params in native PyTorch layouts."""
    keys = jax.random.split(key, 4)
    w_base = jax.random.normal(keys[0], (HID_SIZE, obs_size), jnp.float32) * 0.1
    b_base = jax.random.normal(keys[1], (HID_SIZE,), jnp.float32) * 0.1
    w_head = jax.random.normal(keys[2], (NUM_HEADS, HID_SIZE), jnp.float32) * 0.1
    b_head = jax.random.normal(keys[3], (NUM_HEADS,), jnp.float32) * 0.1
    return w_base, b_base, w_head, b_head


def _reference_forward(x, w_base, b_base, w_head, b_head):
    """Pure-JAX f32 reference (matches the PyTorch module)."""
    h = jnp.maximum(x @ w_base.T + b_base, 0.0)
    z = h @ w_head.T + b_head
    tanh = jnp.tanh(z)
    sp = jax.nn.softplus(z)
    return (tanh[:, 0:1], tanh[:, 1:2], sp[:, 2:3], sp[:, 3:4],
            tanh[:, 4:5], z[:, 5:6])


if __name__ == "__main__":
    B = 2
    OBS_SIZE = 16  # small vector observation

    key = jax.random.PRNGKey(0)
    k_x, k_p = jax.random.split(key)
    x = jax.random.normal(k_x, (B, OBS_SIZE), jnp.float32)
    raw_params = init_params(k_p, OBS_SIZE)
    params = prepare_params(*raw_params)      # one-time packing, outside forward

    # Perf-preferred path: lane-dense [6, B] slab, batch-major x.
    slab = jax.block_until_ready(model_a2c_forward_slab(x, *params))
    # Batch-minor x path (producer can feed [obs, B] to avoid lane padding).
    slab_xt = jax.block_until_ready(model_a2c_forward_slab_xt(x.T, *params))
    # PyTorch-matching tuple of six [B, 1] heads.
    outs = model_a2c_forward(x, *params)

    ref_cols = _reference_forward(x, *raw_params)        # six [B, 1]
    ref_slab = jnp.concatenate(ref_cols, axis=1).T       # [6, B]

    assert slab.shape == (NUM_HEADS, B), slab.shape
    assert jnp.allclose(slab, ref_slab, atol=2e-2, rtol=2e-2), (slab, ref_slab)
    assert jnp.allclose(slab_xt, ref_slab, atol=2e-2, rtol=2e-2), (slab_xt, ref_slab)
    for o, r in zip(outs, ref_cols):
        assert o.shape == (B, 1), o.shape
        assert jnp.allclose(o, r, atol=2e-2, rtol=2e-2), (o, r)

    print("KERNEL_OK")
</pallas_src>

<mosaic_0001>
module attributes {stable_mosaic.version = 11 : i64} {
  func.func @kernel(%arg0: i32, %arg1: memref<128x16xf32, #tpu.memory_space<vmem>>, %arg2: memref<128x16xf32, #tpu.memory_space<vmem>>, %arg3: memref<128x1xf32, #tpu.memory_space<vmem>>, %arg4: memref<8x128xf32, #tpu.memory_space<vmem>>, %arg5: memref<8x1xf32, #tpu.memory_space<vmem>>, %arg6: memref<8x128xf32, #tpu.memory_space<vmem>>) attributes {dimension_semantics = [#tpu.dimension_semantics<parallel>], iteration_bounds = array<i64: 1>, scalar_prefetch = 0 : i64, scratch_operands = 0 : i64, tpu.core_type = #tpu.core_type<tc>, window_params = [{transform_indices = @transform_0, window_bounds = array<i64: 128, 16>}, {pipeline_mode = #tpu.pipeline_mode<synchronous>, transform_indices = @transform_1, window_bounds = array<i64: 128, 16>}, {pipeline_mode = #tpu.pipeline_mode<synchronous>, transform_indices = @transform_2, window_bounds = array<i64: 128, 1>}, {pipeline_mode = #tpu.pipeline_mode<synchronous>, transform_indices = @transform_3, window_bounds = array<i64: 8, 128>}, {pipeline_mode = #tpu.pipeline_mode<synchronous>, transform_indices = @transform_4, window_bounds = array<i64: 8, 1>}, {transform_indices = @transform_5, window_bounds = array<i64: 8, 128>}]} {
    %c0 = arith.constant 0 : index
    %c0_0 = arith.constant 0 : index
    %0 = vector.load %arg1[%c0, %c0_0] : memref<128x16xf32, #tpu.memory_space<vmem>>, vector<128x16xf32>
    %c0_1 = arith.constant 0 : index
    %c0_2 = arith.constant 0 : index
    %1 = vector.load %arg2[%c0_1, %c0_2] : memref<128x16xf32, #tpu.memory_space<vmem>>, vector<128x16xf32>
    %cst = arith.constant dense<0.000000e+00> : vector<128x128xf32>
    %2 = tpu.matmul %1, %0, %cst {dimension_numbers = #tpu.dot_dimension_numbers<[1], [1], [0], [0], [0, 0, 1, 0], [], []>} : vector<128x16xf32>, vector<128x16xf32>, vector<128x128xf32> -> vector<128x128xf32>
    %c0_3 = arith.constant 0 : index
    %c0_4 = arith.constant 0 : index
    %3 = vector.load %arg3[%c0_3, %c0_4] : memref<128x1xf32, #tpu.memory_space<vmem>>, vector<128x1xf32>
    %4 = vector.broadcast %3 : vector<128x1xf32> to vector<128x128xf32>
    %5 = arith.addf %2, %4 : vector<128x128xf32>
    %cst_5 = arith.constant 0.000000e+00 : f32
    %6 = vector.broadcast %cst_5 : f32 to vector<128x128xf32>
    %7 = arith.maximumf %5, %6 : vector<128x128xf32>
    %c0_6 = arith.constant 0 : index
    %c0_7 = arith.constant 0 : index
    %8 = vector.load %arg4[%c0_6, %c0_7] : memref<8x128xf32, #tpu.memory_space<vmem>>, vector<8x128xf32>
    %cst_8 = arith.constant dense<0.000000e+00> : vector<8x128xf32>
    %9 = tpu.matmul %8, %7, %cst_8 {dimension_numbers = #tpu.dot_dimension_numbers<[1], [0], [0], [1], [0, 0, 1, 1], [], []>} : vector<8x128xf32>, vector<128x128xf32>, vector<8x128xf32> -> vector<8x128xf32>
    %c0_9 = arith.constant 0 : index
    %c0_10 = arith.constant 0 : index
    %10 = vector.load %arg5[%c0_9, %c0_10] : memref<8x1xf32, #tpu.memory_space<vmem>>, vector<8x1xf32>
    %11 = vector.broadcast %10 : vector<8x1xf32> to vector<8x128xf32>
    %12 = arith.addf %9, %11 : vector<8x128xf32>
    %13 = tpu.iota {dimensions = array<i32: 0>} : vector<8x128xi32>
    %c0_i32 = arith.constant 0 : i32
    %14 = vector.broadcast %c0_i32 : i32 to vector<8x128xi32>
    %15 = arith.cmpi eq, %13, %14 : vector<8x128xi32>
    %c1_i32 = arith.constant 1 : i32
    %16 = vector.broadcast %c1_i32 : i32 to vector<8x128xi32>
    %17 = arith.cmpi eq, %13, %16 : vector<8x128xi32>
    %18 = arith.ori %15, %17 : vector<8x128xi1>
    %c4_i32 = arith.constant 4 : i32
    %19 = vector.broadcast %c4_i32 : i32 to vector<8x128xi32>
    %20 = arith.cmpi eq, %13, %19 : vector<8x128xi32>
    %21 = arith.ori %18, %20 : vector<8x128xi1>
    %c2_i32 = arith.constant 2 : i32
    %22 = vector.broadcast %c2_i32 : i32 to vector<8x128xi32>
    %23 = arith.cmpi eq, %13, %22 : vector<8x128xi32>
    %c3_i32 = arith.constant 3 : i32
    %24 = vector.broadcast %c3_i32 : i32 to vector<8x128xi32>
    %25 = arith.cmpi eq, %13, %24 : vector<8x128xi32>
    %26 = arith.ori %23, %25 : vector<8x128xi1>
    %27 = math.tanh %12 : vector<8x128xf32>
    %cst_11 = arith.constant 0.000000e+00 : f32
    %28 = vector.broadcast %cst_11 : f32 to vector<8x128xf32>
    %29 = arith.maximumf %12, %28 : vector<8x128xf32>
    %30 = math.absf %12 : vector<8x128xf32>
    %cst_12 = arith.constant 0.000000e+00 : f32
    %31 = vector.broadcast %cst_12 : f32 to vector<8x128xf32>
    %32 = arith.subf %31, %30 : vector<8x128xf32>
    %33 = math.exp %32 : vector<8x128xf32>
    %34 = math.log1p %33 : vector<8x128xf32>
    %35 = arith.addf %29, %34 : vector<8x128xf32>
    %36 = arith.select %26, %35, %12 : vector<8x128xi1>, vector<8x128xf32>
    %37 = arith.select %21, %27, %36 : vector<8x128xi1>, vector<8x128xf32>
    %c0_13 = arith.constant 0 : index
    %c0_14 = arith.constant 0 : index
    %38 = vector.load %arg6[%c0_13, %c0_14] : memref<8x128xf32, #tpu.memory_space<vmem>>, vector<8x128xf32>
    tpu.vector_store %arg6[%c0_13, %c0_14], %37 {strides = array<i32>} : memref<8x128xf32, #tpu.memory_space<vmem>>, vector<8x128xf32>,
    return
  }
  func.func @transform_0(%arg0: i32) -> (i32, i32) {
    %c0_i32 = arith.constant 0 : i32
    %c0_i32_0 = arith.constant 0 : i32
    return %arg0, %c0_i32 : i32, i32
  }
  func.func @transform_1(%arg0: i32) -> (i32, i32) {
    %c0_i32 = arith.constant 0 : i32
    %c0_i32_0 = arith.constant 0 : i32
    %c0_i32_1 = arith.constant 0 : i32
    return %c0_i32, %c0_i32_0 : i32, i32
  }
  func.func @transform_2(%arg0: i32) -> (i32, i32) {
    %c0_i32 = arith.constant 0 : i32
    %c0_i32_0 = arith.constant 0 : i32
    %c0_i32_1 = arith.constant 0 : i32
    return %c0_i32, %c0_i32_0 : i32, i32
  }
  func.func @transform_3(%arg0: i32) -> (i32, i32) {
    %c0_i32 = arith.constant 0 : i32
    %c0_i32_0 = arith.constant 0 : i32
    %c0_i32_1 = arith.constant 0 : i32
    return %c0_i32, %c0_i32_0 : i32, i32
  }
  func.func @transform_4(%arg0: i32) -> (i32, i32) {
    %c0_i32 = arith.constant 0 : i32
    %c0_i32_0 = arith.constant 0 : i32
    %c0_i32_1 = arith.constant 0 : i32
    return %c0_i32, %c0_i32_0 : i32, i32
  }
  func.func @transform_5(%arg0: i32) -> (i32, i32) {
    %c0_i32 = arith.constant 0 : i32
    %c0_i32_0 = arith.constant 0 : i32
    return %c0_i32, %arg0 : i32, i32
  }
}

</mosaic_0001>

<llo_original>
// kernel: model_a2c_forward_slab.1
$region0: #{model_a2c_forward_slab.1}
  #allocation0 [shape = 'u32[]', space=smem, size = 0x4, offset = 0x4, fixed_abs, tag = 'smem constant byte address 0x4 - core index']
  #allocation1 [shape = 'u32[144,128]{1,0:T(1,128)}', space=vmem, size = 0x12000, scoped, tag = 'internal scratch']
  %s0 = inlined_call_operand.vmem [shape: f32[2,16], index: 0, kind: input, shape index: {}]
  %s1 = inlined_call_operand.vmem [shape: f32[128,16], index: 1, kind: input, shape index: {}]
  %s2 = inlined_call_operand.vmem [shape: f32[128,1], index: 2, kind: input, shape index: {}]
  %s3 = inlined_call_operand.vmem [shape: f32[8,128], index: 3, kind: input, shape index: {}]
  %s4 = inlined_call_operand.vmem [shape: f32[8,1], index: 4, kind: input, shape index: {}]
  %s5 = inlined_call_operand.vmem [shape: f32[8,2], index: 5, kind: output, shape index: {}]
  %s6 = sld [smem:[#allocation0]]
  $region30: #{model_a2c_forward_slab.1} parent=0
    _
  %s8 = ssub.s32 1, %s6
  %s9 = scalar_select 0, %s8, %s6
  // Predicated region
  $region2: #{model_a2c_forward_slab.1} parent=0 // pred_check
    _
  $region3: #{model_a2c_forward_slab.1} parent=0 // pred_check_branch
    %11 = sbr.rel (0) target = $region5
  $region4: #{model_a2c_forward_slab.1} parent=0 // pred_region
    _
  $region5: #{model_a2c_forward_slab.1} parent=0 // pred_fallthru
    _
  // Predicated region
  $region6: #{model_a2c_forward_slab.1} parent=0 // pred_check
    _
  $region7: #{model_a2c_forward_slab.1} parent=0 // pred_check_branch
    %13 = sbr.rel (0) target = $region9
  $region8: #{model_a2c_forward_slab.1} parent=0 // pred_region
    _
  $region9: #{model_a2c_forward_slab.1} parent=0 // pred_fallthru
    _
  // Predicated region
  $region10: #{model_a2c_forward_slab.1} parent=0 // pred_check
    _
  $region11: #{model_a2c_forward_slab.1} parent=0 // pred_check_branch
    %15 = sbr.rel (0) target = $region13
  $region12: #{model_a2c_forward_slab.1} parent=0 // pred_region
    _
  $region13: #{model_a2c_forward_slab.1} parent=0 // pred_fallthru
    _
  // Predicated region
  $region14: #{model_a2c_forward_slab.1} parent=0 // pred_check
    _
  $region15: #{model_a2c_forward_slab.1} parent=0 // pred_check_branch
    %17 = sbr.rel (0) target = $region17
  $region16: #{model_a2c_forward_slab.1} parent=0 // pred_region
    _
  $region17: #{model_a2c_forward_slab.1} parent=0 // pred_fallthru
    _
  // Predicated region
  $region18: #{model_a2c_forward_slab.1} parent=0 // pred_check
    _
  $region19: #{model_a2c_forward_slab.1} parent=0 // pred_check_branch
    %19 = sbr.rel (0) target = $region21
  $region20: #{model_a2c_forward_slab.1} parent=0 // pred_region
    _
  $region21: #{model_a2c_forward_slab.1} parent=0 // pred_fallthru
    _
  %v20 = vld [vmem:[%s0] sm:$0xff]
  %v21 = vld [vmem:[%s0 + $0x8] sm:$0xff]
  %v22 = vld [vmem:[%s0 + $0x10] sm:$0xff]
  %v23 = vld [vmem:[%s0 + $0x18] sm:$0xff]
  %v24 = vld [vmem:[%s0 + $0x20] sm:$0xff]
  %v25 = vld [vmem:[%s0 + $0x28] sm:$0xff]
  %v26 = vld [vmem:[%s0 + $0x30] sm:$0xff]
  %v27 = vld [vmem:[%s0 + $0x38] sm:$0xff]
  %v28 = vld [vmem:[%s0 + $0x40] sm:$0xff]
  %v29 = vld [vmem:[%s0 + $0x48] sm:$0xff]
  %v30 = vld [vmem:[%s0 + $0x50] sm:$0xff]
  %v31 = vld [vmem:[%s0 + $0x58] sm:$0xff]
  %v32 = vld [vmem:[%s0 + $0x60] sm:$0xff]
  %v33 = vld [vmem:[%s0 + $0x68] sm:$0xff]
  %v34 = vld [vmem:[%s0 + $0x70] sm:$0xff]
  %v35 = vld [vmem:[%s0 + $0x78] sm:$0xff]
  %v36 = vld [vmem:[%s1] sm:$0xff]
  %v37 = vld [vmem:[%s1 + $0x8] sm:$0xff]
  %v38 = vld [vmem:[%s1 + $0x10] sm:$0xff]
  %v39 = vld [vmem:[%s1 + $0x18] sm:$0xff]
  %v40 = vld [vmem:[%s1 + $0x20] sm:$0xff]
  %v41 = vld [vmem:[%s1 + $0x28] sm:$0xff]
  %v42 = vld [vmem:[%s1 + $0x30] sm:$0xff]
  %v43 = vld [vmem:[%s1 + $0x38] sm:$0xff]
  %v44 = vld [vmem:[%s1 + $0x40] sm:$0xff]
  %v45 = vld [vmem:[%s1 + $0x48] sm:$0xff]
  %v46 = vld [vmem:[%s1 + $0x50] sm:$0xff]
  %v47 = vld [vmem:[%s1 + $0x58] sm:$0xff]
  %v48 = vld [vmem:[%s1 + $0x60] sm:$0xff]
  %v49 = vld [vmem:[%s1 + $0x68] sm:$0xff]
  %v50 = vld [vmem:[%s1 + $0x70] sm:$0xff]
  %v51 = vld [vmem:[%s1 + $0x78] sm:$0xff]
  %v52 = vld [vmem:[%s2] sm:$0xff]
  %v53 = vld [vmem:[%s2 + $0x8] sm:$0xff]
  %v54 = vld [vmem:[%s2 + $0x10] sm:$0xff]
  %v55 = vld [vmem:[%s2 + $0x18] sm:$0xff]
  %v56 = vld [vmem:[%s2 + $0x20] sm:$0xff]
  %v57 = vld [vmem:[%s2 + $0x28] sm:$0xff]
  %v58 = vld [vmem:[%s2 + $0x30] sm:$0xff]
  %v59 = vld [vmem:[%s2 + $0x38] sm:$0xff]
  %v60 = vld [vmem:[%s2 + $0x40] sm:$0xff]
  %v61 = vld [vmem:[%s2 + $0x48] sm:$0xff]
  %v62 = vld [vmem:[%s2 + $0x50] sm:$0xff]
  %v63 = vld [vmem:[%s2 + $0x58] sm:$0xff]
  %v64 = vld [vmem:[%s2 + $0x60] sm:$0xff]
  %v65 = vld [vmem:[%s2 + $0x68] sm:$0xff]
  %v66 = vld [vmem:[%s2 + $0x70] sm:$0xff]
  %v67 = vld [vmem:[%s2 + $0x78] sm:$0xff]
  %69 = vset.pattern.permute.xlu0 0
  %70 = vperm.xlu0 %69, %v52
  %v71 = vpop.permute.xlu0 %70
  %74 = vset.pattern.permute.xlu0 0
  %75 = vperm.xlu0 %74, %v53
  %v76 = vpop.permute.xlu0 %75
  %79 = vset.pattern.permute.xlu0 0
  %80 = vperm.xlu0 %79, %v54
  %v81 = vpop.permute.xlu0 %80
  %84 = vset.pattern.permute.xlu0 0
  %85 = vperm.xlu0 %84, %v55
  %v86 = vpop.permute.xlu0 %85
  %89 = vset.pattern.permute.xlu0 0
  %90 = vperm.xlu0 %89, %v56
  %v91 = vpop.permute.xlu0 %90
  %94 = vset.pattern.permute.xlu0 0
  %95 = vperm.xlu0 %94, %v57
  %v96 = vpop.permute.xlu0 %95
  %99 = vset.pattern.permute.xlu0 0
  %100 = vperm.xlu0 %99, %v58
  %v101 = vpop.permute.xlu0 %100
  %104 = vset.pattern.permute.xlu0 0
  %105 = vperm.xlu0 %104, %v59
  %v106 = vpop.permute.xlu0 %105
  %109 = vset.pattern.permute.xlu0 0
  %110 = vperm.xlu0 %109, %v60
  %v111 = vpop.permute.xlu0 %110
  %114 = vset.pattern.permute.xlu0 0
  %115 = vperm.xlu0 %114, %v61
  %v116 = vpop.permute.xlu0 %115
  %119 = vset.pattern.permute.xlu0 0
  %120 = vperm.xlu0 %119, %v62
  %v121 = vpop.permute.xlu0 %120
  %124 = vset.pattern.permute.xlu0 0
  %125 = vperm.xlu0 %124, %v63
  %v126 = vpop.permute.xlu0 %125
  %129 = vset.pattern.permute.xlu0 0
  %130 = vperm.xlu0 %129, %v64
  %v131 = vpop.permute.xlu0 %130
  %134 = vset.pattern.permute.xlu0 0
  %135 = vperm.xlu0 %134, %v65
  %v136 = vpop.permute.xlu0 %135
  %139 = vset.pattern.permute.xlu0 0
  %140 = vperm.xlu0 %139, %v66
  %v141 = vpop.permute.xlu0 %140
  %144 = vset.pattern.permute.xlu0 0
  %145 = vperm.xlu0 %144, %v67
  %v146 = vpop.permute.xlu0 %145
  %vm148 = vcmask 130048
  %v150 = vsel %vm148, %v36, 0
  %v153 = vsel %vm148, %v37, 0
  %v156 = vsel %vm148, %v38, 0
  %v159 = vsel %vm148, %v39, 0
  %v162 = vsel %vm148, %v40, 0
  %v165 = vsel %vm148, %v41, 0
  %v168 = vsel %vm148, %v42, 0
  %v171 = vsel %vm148, %v43, 0
  %v174 = vsel %vm148, %v44, 0
  %v177 = vsel %vm148, %v45, 0
  %v180 = vsel %vm148, %v46, 0
  %v183 = vsel %vm148, %v47, 0
  %v186 = vsel %vm148, %v48, 0
  %v189 = vsel %vm148, %v49, 0
  %v192 = vsel %vm148, %v50, 0
  %v195 = vsel %vm148, %v51, 0
  %v198 = vsel %vm148, %v20, 0
  %v201 = vsel %vm148, %v21, 0
  %v204 = vsel %vm148, %v22, 0
  %v207 = vsel %vm148, %v23, 0
  %v210 = vsel %vm148, %v24, 0
  %v213 = vsel %vm148, %v25, 0
  %v216 = vsel %vm148, %v26, 0
  %v219 = vsel %vm148, %v27, 0
  %v222 = vsel %vm148, %v28, 0
  %v225 = vsel %vm148, %v29, 0
  %v228 = vsel %vm148, %v30, 0
  %v231 = vsel %vm148, %v31, 0
  %v234 = vsel %vm148, %v32, 0
  %v237 = vsel %vm148, %v33, 0
  %v240 = vsel %vm148, %v34, 0
  %v243 = vsel %vm148, %v35, 0
  %245 = vmatprep.subr.mxu0 0.0
  %246 = vmatpush1.xpose.msra.mxu0 %v243
  %247 = vmatprep.subr.mxu0 0.0
  %248 = vmatpush1.xpose.msra.mxu0 %v240
  %249 = vmatprep.subr.mxu0 0.0
  %250 = vmatpush1.xpose.msra.mxu0 %v237
  %251 = vmatprep.subr.mxu0 0.0
  %252 = vmatpush1.xpose.msra.mxu0 %v234
  %253 = vmatprep.subr.mxu0 0.0
  %254 = vmatpush1.xpose.msra.mxu0 %v231
  %255 = vmatprep.subr.mxu0 0.0
  %256 = vmatpush1.xpose.msra.mxu0 %v228
  %257 = vmatprep.subr.mxu0 0.0
  %258 = vmatpush1.xpose.msra.mxu0 %v225
  %259 = vmatprep.subr.mxu0 0.0
  %260 = vmatpush1.xpose.msra.mxu0 %v222
  %261 = vmatprep.subr.mxu0 0.0
  %262 = vmatpush1.xpose.msra.mxu0 %v219
  %263 = vmatprep.subr.mxu0 0.0
  %264 = vmatpush1.xpose.msra.mxu0 %v216
  %265 = vmatprep.subr.mxu0 0.0
  %266 = vmatpush1.xpose.msra.mxu0 %v213
  %267 = vmatprep.subr.mxu0 0.0
  %268 = vmatpush1.xpose.msra.mxu0 %v210
  %269 = vmatprep.subr.mxu0 0.0
  %270 = vmatpush1.xpose.msra.mxu0 %v207
  %271 = vmatprep.subr.mxu0 0.0
  %272 = vmatpush1.xpose.msra.mxu0 %v204
  %273 = vmatprep.subr.mxu0 0.0
  %274 = vmatpush1.xpose.msra.mxu0 %v201
  %275 = vmatprep.subr.mxu0 0.0
  %276 = vmatpush1.xpose.msra.mxu0 %v198
  %277 = vmatprep.subr.mxu0 0.0
  %278 = vmatpush2.xpose.msra.mxu0 0.0
  %279 = vmatprep.subr.mxu0 0.0
  %280 = vmatpush2.xpose.msra.mxu0 0.0
  %281 = vmatprep.subr.mxu0 0.0
  %282 = vmatpush2.xpose.msra.mxu0 0.0
  %283 = vmatprep.subr.mxu0 0.0
  %284 = vmatpush2.xpose.msra.mxu0 0.0
  %285 = vmatprep.subr.mxu0 0.0
  %286 = vmatpush2.xpose.msra.mxu0 0.0
  %287 = vmatprep.subr.mxu0 0.0
  %288 = vmatpush2.xpose.msra.mxu0 0.0
  %289 = vmatprep.subr.mxu0 0.0
  %290 = vmatpush2.xpose.msra.mxu0 0.0
  %291 = vmatprep.subr.mxu0 0.0
  %292 = vmatpush2.xpose.msra.mxu0 0.0
  %293 = vmatprep.subr.mxu0 0.0
  %294 = vmatpush2.xpose.msra.mxu0 0.0
  %295 = vmatprep.subr.mxu0 0.0
  %296 = vmatpush2.xpose.msra.mxu0 0.0
  %297 = vmatprep.subr.mxu0 0.0
  %298 = vmatpush2.xpose.msra.mxu0 0.0
  %299 = vmatprep.subr.mxu0 0.0
  %300 = vmatpush2.xpose.msra.mxu0 0.0
  %301 = vmatprep.subr.mxu0 0.0
  %302 = vmatpush2.xpose.msra.mxu0 0.0
  %303 = vmatprep.subr.mxu0 0.0
  %304 = vmatpush2.xpose.msra.mxu0 0.0
  %305 = vmatprep.subr.mxu0 0.0
  %306 = vmatpush2.xpose.msra.mxu0 0.0
  %307 = vmatprep.subr.mxu0 0.0
  %308 = vmatpush2.xpose.msra.mxu0 0.0
  %309 = vmatprep.mubr.f32.mxu0 0.0
  %310 = vmatmul.mubr.f32.gmra.mxu0 %v150
  %v311 = vpop.f32.mrf.mxu0
  %v312 = vadd.f32 %v71, %v311
  %v313 = vpop.f32.mrf.mxu0
  %314 = vmatprep.mubr.f32.mxu0 0.0
  %315 = vmatmul.mubr.f32.gmra.mxu0 %v153
  %v316 = vpop.f32.mrf.mxu0
  %v317 = vadd.f32 %v76, %v316
  %v318 = vpop.f32.mrf.mxu0
  %319 = vmatprep.mubr.f32.mxu0 0.0
  %320 = vmatmul.mubr.f32.gmra.mxu0 %v156
  %v321 = vpop.f32.mrf.mxu0
  %v322 = vadd.f32 %v81, %v321
  %v323 = vpop.f32.mrf.mxu0
  %324 = vmatprep.mubr.f32.mxu0 0.0
  %325 = vmatmul.mubr.f32.gmra.mxu0 %v159
  %v326 = vpop.f32.mrf.mxu0
  %v327 = vadd.f32 %v86, %v326
  %v328 = vpop.f32.mrf.mxu0
  %329 = vmatprep.mubr.f32.mxu0 0.0
  %330 = vmatmul.mubr.f32.gmra.mxu0 %v162
  %v331 = vpop.f32.mrf.mxu0
  %v332 = vadd.f32 %v91, %v331
  %v333 = vpop.f32.mrf.mxu0
  %334 = vmatprep.mubr.f32.mxu0 0.0
  %335 = vmatmul.mubr.f32.gmra.mxu0 %v165
  %v336 = vpop.f32.mrf.mxu0
  %v337 = vadd.f32 %v96, %v336
  %v338 = vpop.f32.mrf.mxu0
  %339 = vmatprep.mubr.f32.mxu0 0.0
  %340 = vmatmul.mubr.f32.gmra.mxu0 %v168
  %v341 = vpop.f32.mrf.mxu0
  %v342 = vadd.f32 %v101, %v341
  %v343 = vpop.f32.mrf.mxu0
  %344 = vmatprep.mubr.f32.mxu0 0.0
  %345 = vmatmul.mubr.f32.gmra.mxu0 %v171
  %v346 = vpop.f32.mrf.mxu0
  %v347 = vadd.f32 %v106, %v346
  %v348 = vpop.f32.mrf.mxu0
  %349 = vmatprep.mubr.f32.mxu0 0.0
  %350 = vmatmul.mubr.f32.gmra.mxu0 %v174
  %v351 = vpop.f32.mrf.mxu0
  %v352 = vadd.f32 %v111, %v351
  %v353 = vpop.f32.mrf.mxu0
  %354 = vmatprep.mubr.f32.mxu0 0.0
  %355 = vmatmul.mubr.f32.gmra.mxu0 %v177
  %v356 = vpop.f32.mrf.mxu0
  %v357 = vadd.f32 %v116, %v356
  %v358 = vpop.f32.mrf.mxu0
  %359 = vmatprep.mubr.f32.mxu0 0.0
  %360 = vmatmul.mubr.f32.gmra.mxu0 %v180
  %v361 = vpop.f32.mrf.mxu0
  %v362 = vadd.f32 %v121, %v361
  %v363 = vpop.f32.mrf.mxu0
  %364 = vmatprep.mubr.f32.mxu0 0.0
  %365 = vmatmul.mubr.f32.gmra.mxu0 %v183
  %v366 = vpop.f32.mrf.mxu0
  %v367 = vadd.f32 %v126, %v366
  %v368 = vpop.f32.mrf.mxu0
  %369 = vmatprep.mubr.f32.mxu0 0.0
  %370 = vmatmul.mubr.f32.gmra.mxu0 %v186
  %v371 = vpop.f32.mrf.mxu0
  %v372 = vadd.f32 %v131, %v371
  %v373 = vpop.f32.mrf.mxu0
  %374 = vmatprep.mubr.f32.mxu0 0.0
  %375 = vmatmul.mubr.f32.gmra.mxu0 %v189
  %v376 = vpop.f32.mrf.mxu0
  %v377 = vadd.f32 %v136, %v376
  %v378 = vpop.f32.mrf.mxu0
  %379 = vmatprep.mubr.f32.mxu0 0.0
  %380 = vmatmul.mubr.f32.gmra.mxu0 %v192
  %v381 = vpop.f32.mrf.mxu0
  %v382 = vadd.f32 %v141, %v381
  %v383 = vpop.f32.mrf.mxu0
  %384 = vmatprep.mubr.f32.mxu0 0.0
  %385 = vmatmul.mubr.f32.gmra.mxu0 %v195
  %v386 = vpop.f32.mrf.mxu0
  %v387 = vadd.f32 %v146, %v386
  %v388 = vpop.f32.mrf.mxu0
  %389 = vdwg.mxu0
  %v390 = vmax.f32 %v312, 0.0
  %v391 = vmax.f32 %v317, 0.0
  %v392 = vmax.f32 %v322, 0.0
  %v393 = vmax.f32 %v327, 0.0
  %v394 = vmax.f32 %v332, 0.0
  %v395 = vmax.f32 %v337, 0.0
  %v396 = vmax.f32 %v342, 0.0
  %v397 = vmax.f32 %v347, 0.0
  %v398 = vmax.f32 %v352, 0.0
  %v399 = vmax.f32 %v357, 0.0
  %v400 = vmax.f32 %v362, 0.0
  %v401 = vmax.f32 %v367, 0.0
  %v402 = vmax.f32 %v372, 0.0
  %v403 = vmax.f32 %v377, 0.0
  %v404 = vmax.f32 %v382, 0.0
  %v405 = vmax.f32 %v387, 0.0
  %v406 = vld [vmem:[%s3] sm:$0xff]
  %v407 = vld [vmem:[%s4] sm:$0xff]
  %409 = vset.pattern.permute.xlu0 0
  %410 = vperm.xlu0 %409, %v407
  %v411 = vpop.permute.xlu0 %410
  %413 = vmatprep.subr.mxu0 0.0
  %414 = vmatpush1.msra.mxu0 %v405
  %415 = vmatprep.subr.mxu0 0.0
  %416 = vmatpush1.msra.mxu0 %v404
  %417 = vmatprep.subr.mxu0 0.0
  %418 = vmatpush1.msra.mxu0 %v403
  %419 = vmatprep.subr.mxu0 0.0
  %420 = vmatpush1.msra.mxu0 %v402
  %421 = vmatprep.subr.mxu0 0.0
  %422 = vmatpush1.msra.mxu0 %v401
  %423 = vmatprep.subr.mxu0 0.0
  %424 = vmatpush1.msra.mxu0 %v400
  %425 = vmatprep.subr.mxu0 0.0
  %426 = vmatpush1.msra.mxu0 %v399
  %427 = vmatprep.subr.mxu0 0.0
  %428 = vmatpush1.msra.mxu0 %v398
  %429 = vmatprep.subr.mxu0 0.0
  %430 = vmatpush1.msra.mxu0 %v397
  %431 = vmatprep.subr.mxu0 0.0
  %432 = vmatpush1.msra.mxu0 %v396
  %433 = vmatprep.subr.mxu0 0.0
  %434 = vmatpush1.msra.mxu0 %v395
  %435 = vmatprep.subr.mxu0 0.0
  %436 = vmatpush1.msra.mxu0 %v394
  %437 = vmatprep.subr.mxu0 0.0
  %438 = vmatpush1.msra.mxu0 %v393
  %439 = vmatprep.subr.mxu0 0.0
  %440 = vmatpush1.msra.mxu0 %v392
  %441 = vmatprep.subr.mxu0 0.0
  %442 = vmatpush1.msra.mxu0 %v391
  %443 = vmatprep.subr.mxu0 0.0
  %444 = vmatpush1.msra.mxu0 %v390
  %445 = vmatprep.subr.mxu0 0.0
  %446 = vmatpush2.msra.mxu0 0.0
  %447 = vmatprep.subr.mxu0 0.0
  %448 = vmatpush2.msra.mxu0 0.0
  %449 = vmatprep.subr.mxu0 0.0
  %450 = vmatpush2.msra.mxu0 0.0
  %451 = vmatprep.subr.mxu0 0.0
  %452 = vmatpush2.msra.mxu0 0.0
  %453 = vmatprep.subr.mxu0 0.0
  %454 = vmatpush2.msra.mxu0 0.0
  %455 = vmatprep.subr.mxu0 0.0
  %456 = vmatpush2.msra.mxu0 0.0
  %457 = vmatprep.subr.mxu0 0.0
  %458 = vmatpush2.msra.mxu0 0.0
  %459 = vmatprep.subr.mxu0 0.0
  %460 = vmatpush2.msra.mxu0 0.0
  %461 = vmatprep.subr.mxu0 0.0
  %462 = vmatpush2.msra.mxu0 0.0
  %463 = vmatprep.subr.mxu0 0.0
  %464 = vmatpush2.msra.mxu0 0.0
  %465 = vmatprep.subr.mxu0 0.0
  %466 = vmatpush2.msra.mxu0 0.0
  %467 = vmatprep.subr.mxu0 0.0
  %468 = vmatpush2.msra.mxu0 0.0
  %469 = vmatprep.subr.mxu0 0.0
  %470 = vmatpush2.msra.mxu0 0.0
  %471 = vmatprep.subr.mxu0 0.0
  %472 = vmatpush2.msra.mxu0 0.0
  %473 = vmatprep.subr.mxu0 0.0
  %474 = vmatpush2.msra.mxu0 0.0
  %475 = vmatprep.subr.mxu0 0.0
  %476 = vmatpush2.msra.mxu0 0.0
  %477 = vmatprep.mubr.f32.mxu0 0.0
  %478 = vmatmul.mubr.f32.gmra.mxu0 %v406
  %v479 = vpop.f32.mrf.mxu0
  %v480 = vadd.f32 %v411, %v479
  %v481 = vpop.f32.mrf.mxu0
  %482 = vdwg.mxu0
  %v483 = vlaneseq
  %v484 = vshrl.u32 %v483, 7
  %vm485 = vcmp.eq.s32.totalorder %v484, 0
  %vm486 = vcmp.eq.s32.totalorder %v484, 1
  %vm487 = vmor %vm485, %vm486
  %vm488 = vcmp.eq.s32.totalorder %v484, 4
  %vm489 = vmor %vm487, %vm488
  %vm490 = vcmp.eq.s32.totalorder %v484, 2
  %vm491 = vcmp.eq.s32.totalorder %v484, 3
  %vm492 = vmor %vm490, %vm491
  %v493 = vtanh.pop %v480
  %v494 = vmax.f32 %v480, 0.0
  %v495 = vand.u32 2147483647, %v480
  %v496 = vsub.f32 0.0, %v495
  %v497 = vmul.f32 %v496, 1.442695
  %v498 = vpow.pop %v497
  %v499 = vadd.f32 %v498, 1.0
  %v500 = vlog2.pop %v499
  %v501 = vmul.f32 %v500, 0.6931472
  %v502 = vmul.f32 -0.5, %v498
  %v503 = vadd.f32 %v502, 1.0
  %v504 = vmul.f32 %v503, %v498
  %v505 = vand.u32 2147483647, %v498
  %vm506 = vcmp.lt.f32.partialorder %v505, 0.0004427343
  %v507 = vsel %vm506, %v504, %v501
  %v508 = vadd.f32 %v494, %v507
  %v509 = vsel %vm492, %v508, %v480
  %v510 = vsel %vm489, %v493, %v509
  %511 = vst [vmem:[%s5] sm:$0xff] %v510
  // Predicated region
  $region22: #{model_a2c_forward_slab.1} parent=0 // pred_check
    _
  $region23: #{model_a2c_forward_slab.1} parent=0 // pred_check_branch
    %513 = sbr.rel (0) target = $region25
  $region24: #{model_a2c_forward_slab.1} parent=0 // pred_region
    _
  $region25: #{model_a2c_forward_slab.1} parent=0 // pred_fallthru
    _
  // Predicated region
  $region26: #{model_a2c_forward_slab.1} parent=0 // pred_check
    _
  $region27: #{model_a2c_forward_slab.1} parent=0 // pred_check_branch
    %515 = sbr.rel (0) target = $region29
  $region28: #{model_a2c_forward_slab.1} parent=0 // pred_region
    _
  $region29: #{model_a2c_forward_slab.1} parent=0 // pred_fallthru
    _

</llo_original>
